<compile_context>
chip_gen: v7x
topology: tpu7x:2x2x1
jax: 0.10.0
libtpu: 0.0.40
codegen_flags: <defaults>
</compile_context>

<pallas_src>
import jax
import jax.numpy as jnp
from jax.experimental import pallas as pl
from jax.experimental.pallas import tpu as pltpu

ITEM_MAX_LEN = 50
USER_MAX_LEN = 50


def _round_up(x, m):
    return (x + m - 1) // m * m


def _vmem_limit_bytes():
    # ~3/4 of physical VMEM, capped at 96 MiB (v5e/v6e: 128 MiB, v7x: 64 MiB/TC).
    try:
        cap = int(pltpu.get_tpu_info().vmem_capacity_bytes)
        return min((cap * 3) // 4, 96 * 1024 * 1024)
    except Exception:
        return 48 * 1024 * 1024


VMEM_LIMIT = _vmem_limit_bytes()


# ----------------------------------------------------------------------------
# Tiling helpers
# ----------------------------------------------------------------------------
def _pick_tile(n, target):
    """Row tile (multiple of 8) and padded row count (multiple of tile).

    Forces >=2 grid steps only when there is enough work for both v7x
    TensorCores; on tiny graphs extra steps are pure overhead.
    """
    n8 = _round_up(max(n, 8), 8)
    tile = min(_round_up(target, 8), n8)
    if n8 >= 1024 and n8 // tile < 2:
        tile = _round_up((n8 + 1) // 2, 8)
    n_pad = _round_up(n8, tile)
    return tile, n_pad


def _pad_rows(x, n_pad):
    n = x.shape[0]
    if n == n_pad:
        return x
    pad = [(0, n_pad - n)] + [(0, 0)] * (x.ndim - 1)
    return jnp.pad(x, pad)


# ----------------------------------------------------------------------------
# Pallas kernels
# ----------------------------------------------------------------------------
def _linear_kernel(x_ref, w_ref, o_ref):
    # y = x @ W^T  (W already transposed to [Din, Dout]); bf16 in, f32 acc,
    # bf16 out (no f32 HBM roundtrip).
    o_ref[...] = jnp.dot(x_ref[...], w_ref[...],
                         preferred_element_type=jnp.float32).astype(o_ref.dtype)


def pallas_linear(x, w_t_bf16, *, target_tile=512, out_dtype=jnp.bfloat16):
    n, din = x.shape
    dout = w_t_bf16.shape[1]
    tile, n_pad = _pick_tile(n, target_tile)
    xp = _pad_rows(x.astype(jnp.bfloat16), n_pad)
    out = pl.pallas_call(
        _linear_kernel,
        out_shape=jax.ShapeDtypeStruct((n_pad, dout), out_dtype),
        grid=(n_pad // tile,),
        in_specs=[pl.BlockSpec((tile, din), lambda i: (i, 0)),
                  pl.BlockSpec((din, dout), lambda i: (0, 0))],
        out_specs=pl.BlockSpec((tile, dout), lambda i: (i, 0)),
        compiler_params=pltpu.CompilerParams(
            dimension_semantics=("parallel",),
            vmem_limit_bytes=VMEM_LIMIT),
    )(xp, w_t_bf16.astype(jnp.bfloat16))
    return out[:n]


def _dsgr_reduce_kernel(nbr_ref, time_ref, dstw_ref, orig_ref, src_ref,
                        dqt_ref, dk_ref, wagg_ref, wupd_ref, out_ref):
    T, M = nbr_ref.shape
    D = dstw_ref.shape[1]
    n_src = src_ref.shape[0]
    scale = 1.0 / jnp.sqrt(jnp.float32(D))

    nbr = nbr_ref[...]                                    # [T, M] int32
    t = time_ref[...]                                     # [T, M] int32
    dstw = dstw_ref[...].astype(jnp.float32)              # [T, D]

    # ---- in-kernel mailbox gather: one-hot(neighbor ids) @ resident projected
    # source table (bf16, MXU).  The [T, M, D] stream never touches HBM.
    # TODO(synk): for large node counts replace the one-hot matmul with a DMA
    # row-gather of the source table (scalar-prefetched neighbor ids).
    src_cols = jax.lax.broadcasted_iota(jnp.int32, (T, M, n_src), 2)
    sel = (nbr[:, :, None] == src_cols).astype(jnp.bfloat16)       # [T, M, n_src]
    mail = jnp.dot(sel.reshape(T * M, n_src), src_ref[...],
                   preferred_element_type=jnp.float32)
    mail = mail.reshape(T, M, D).astype(jnp.bfloat16)              # exact bf16 rows

    # ---- timestamp ranks (argsort-of-argsort) with index tie-break so equal
    # timestamps still get distinct ranks (matches torch semantics on ties).
    ti = t[:, :, None]
    tj = t[:, None, :]
    idx_i = jax.lax.broadcasted_iota(jnp.int32, (T, M, M), 1)
    idx_j = jax.lax.broadcasted_iota(jnp.int32, (T, M, M), 2)
    before = jnp.logical_or(tj < ti, jnp.logical_and(tj == ti, idx_j < idx_i))
    order = jnp.sum(before.astype(jnp.int32), axis=2)              # [T, M]
    reorder = (M - 1) - order                                      # values in [0, M)
    oh = (reorder[:, :, None] == idx_j).astype(jnp.float32)        # [T, M, M] perm

    # ---- long-term attention; date-emb terms kept in [T, M] / [M, D] space:
    #   e_date[t,m]   = (dstw @ dq^T)[t, reorder[t,m]]
    #   h_long_date   = (perm(alpha)) @ dk
    sq = jnp.dot(dstw, dqt_ref[...], preferred_element_type=jnp.float32)   # [T, M]
    e = (jnp.sum(oh * sq[:, None, :], axis=2)
         + jnp.sum(mail.astype(jnp.float32) * dstw[:, None, :], axis=2)) * scale
    e = e - jnp.max(e, axis=1, keepdims=True)
    p = jnp.exp(e)
    alpha = p * pl.reciprocal(jnp.sum(p, axis=1, keepdims=True), approx=True)
    beta = jnp.sum(alpha[:, :, None] * oh, axis=1)                          # [T, M]
    h_long = (jnp.sum(alpha[:, :, None] * mail.astype(jnp.float32), axis=1)
              + jnp.dot(beta, dk_ref[...], preferred_element_type=jnp.float32))

    # ---- short-term attention: query = message with the latest timestamp
    # (first-occurrence tie-break == torch.argmax).
    col = jax.lax.broadcasted_iota(jnp.int32, (T, M), 1)
    tmax = jnp.max(t, axis=1, keepdims=True)
    amax = jnp.min(jnp.where(t == tmax, col, M), axis=1, keepdims=True)
    sel_last = (col == amax).astype(jnp.float32)                            # [T, M]
    last_emb = jnp.sum(sel_last[:, :, None] * mail.astype(jnp.float32), axis=1)
    e1 = jnp.sum(last_emb[:, None, :] * mail.astype(jnp.float32), axis=2) * scale
    e1 = e1 - jnp.max(e1, axis=1, keepdims=True)
    p1 = jnp.exp(e1)
    alpha1 = p1 * pl.reciprocal(jnp.sum(p1, axis=1, keepdims=True), approx=True)
    h_short = jnp.sum(alpha1[:, :, None] * mail.astype(jnp.float32), axis=1)

    # ---- agg_gate(cat([h_long, h_short])) + tanh(update(cat([agg, orig])))
    # bf16 inputs/weights, f32 accumulation; weight halves read as ref slices
    # (no value-slice materialization).
    # TODO(synk): fuse each pair into a single K=2D dot via an in-kernel concat
    # once D >= 128 (fills the 256-deep MXU on v6e/v7x).
    agg = (jnp.dot(h_long.astype(jnp.bfloat16), wagg_ref[:D, :],
                   preferred_element_type=jnp.float32)
           + jnp.dot(h_short.astype(jnp.bfloat16), wagg_ref[D:, :],
                     preferred_element_type=jnp.float32))
    upd = (jnp.dot(agg.astype(jnp.bfloat16), wupd_ref[:D, :],
                   preferred_element_type=jnp.float32)
           + jnp.dot(orig_ref[...], wupd_ref[D:, :],
                     preferred_element_type=jnp.float32))
    out_ref[...] = jnp.tanh(upd)


def dsgr_reduce(nbr, times, src_tbl_bf16, dstw_bf16, orig,
                date_q_t, date_k, w_agg_t_bf16, w_upd_t_bf16,
                *, target_tile=256):
    N, M = nbr.shape
    D = dstw_bf16.shape[1]
    tile, n_pad = _pick_tile(N, target_tile)

    nbr_p = _pad_rows(nbr.astype(jnp.int32), n_pad)
    time_p = _pad_rows(times.astype(jnp.int32), n_pad)
    dstw_p = _pad_rows(dstw_bf16, n_pad)
    orig_p = _pad_rows(orig.astype(jnp.bfloat16), n_pad)
    n_src_pad = _round_up(src_tbl_bf16.shape[0], 8)
    src_p = _pad_rows(src_tbl_bf16, n_src_pad)

    out = pl.pallas_call(
        _dsgr_reduce_kernel,
        out_shape=jax.ShapeDtypeStruct((n_pad, D), jnp.float32),
        grid=(n_pad // tile,),
        in_specs=[
            pl.BlockSpec((tile, M), lambda i: (i, 0)),          # neighbor ids
            pl.BlockSpec((tile, M), lambda i: (i, 0)),          # times (int32)
            pl.BlockSpec((tile, D), lambda i: (i, 0)),          # projected dst (bf16)
            pl.BlockSpec((tile, D), lambda i: (i, 0)),          # original dst (bf16)
            pl.BlockSpec((n_src_pad, D), lambda i: (0, 0)),     # projected src table
            pl.BlockSpec((D, M), lambda i: (0, 0)),             # date_emb^T   (f32)
            pl.BlockSpec((M, D), lambda i: (0, 0)),             # date_emb_k   (f32)
            pl.BlockSpec((2 * D, D), lambda i: (0, 0)),         # agg_gate^T   (bf16)
            pl.BlockSpec((2 * D, D), lambda i: (0, 0)),         # update^T     (bf16)
        ],
        out_specs=pl.BlockSpec((tile, D), lambda i: (i, 0)),
        compiler_params=pltpu.CompilerParams(
            dimension_semantics=("parallel",),
            vmem_limit_bytes=VMEM_LIMIT),
    )(nbr_p, time_p, dstw_p, orig_p, src_p,
      date_q_t.astype(jnp.float32), date_k.astype(jnp.float32),
      w_agg_t_bf16, w_upd_t_bf16)
    return out[:N]


def _score_kernel(u_ref, rwt_ref, o_ref):
    o_ref[...] = jnp.dot(u_ref[...], rwt_ref[...],
                         preferred_element_type=jnp.float32)


def dsgr_score(unified_bf16, score_tbl, n_recipes):
    B, D = unified_bf16.shape
    r_pad = score_tbl.shape[1]
    tile_r = min(1024, r_pad)          # lane-dense output tiles (>=128 wide)
    b_pad = _round_up(max(B, 8), 8)
    u = _pad_rows(unified_bf16, b_pad)
    out = pl.pallas_call(
        _score_kernel,
        out_shape=jax.ShapeDtypeStruct((b_pad, r_pad), jnp.float32),
        grid=(r_pad // tile_r,),
        in_specs=[pl.BlockSpec((b_pad, D), lambda j: (0, 0)),
                  pl.BlockSpec((D, tile_r), lambda j: (0, j))],
        out_specs=pl.BlockSpec((b_pad, tile_r), lambda j: (0, j)),
        compiler_params=pltpu.CompilerParams(
            dimension_semantics=("parallel",),
            vmem_limit_bytes=VMEM_LIMIT),
    )(u, score_tbl)
    return out[:B, :n_recipes]


# ----------------------------------------------------------------------------
# Parameters (deterministic synthetic init — no checkpoint loading)
# ----------------------------------------------------------------------------
def init_params(key, n_users, n_recipes, hidden, nlayers):
    def nrm(k, shape, scale=0.1):
        return scale * jax.random.normal(k, shape, dtype=jnp.float32)

    keys = jax.random.split(key, 3 + nlayers)
    params = {
        "user_emb": nrm(keys[0], (n_users, hidden)),
        "recipe_emb": nrm(keys[1], (n_recipes, hidden)),
        "unified_map": nrm(keys[2], (hidden, nlayers * hidden)),  # torch [out, in]
        "layers": [],
    }
    for li in range(nlayers):
        lk = jax.random.split(keys[3 + li], 12)
        params["layers"].append({
            "agg_gate_user": nrm(lk[0], (hidden, 2 * hidden)),
            "agg_gate_recipe": nrm(lk[1], (hidden, 2 * hidden)),
            "user_weight": nrm(lk[2], (hidden, hidden)),
            "recipe_weight": nrm(lk[3], (hidden, hidden)),
            "user_update": nrm(lk[4], (hidden, 2 * hidden)),
            "recipe_update": nrm(lk[5], (hidden, 2 * hidden)),
            "user_date_emb": nrm(lk[6], (ITEM_MAX_LEN, hidden)),
            "user_date_emb_k": nrm(lk[7], (ITEM_MAX_LEN, hidden)),
            "recipe_date_emb": nrm(lk[8], (USER_MAX_LEN, hidden)),
            "recipe_date_emb_k": nrm(lk[9], (USER_MAX_LEN, hidden)),
            # user_last_weight / recipe_last_weight are unused in forward().
        })
    return params


def prepare_params(params, Mu, Mi):
    """Parameter-derived transposes / casts / padded tables, hoisted out of the
    forward path (computed once, reused every call)."""
    D = params["user_emb"].shape[1]
    R = params["recipe_emb"].shape[0]
    r_pad = _round_up(R, 128)
    if r_pad > 1024:
        r_pad = _round_up(r_pad, 1024)
    score_tbl = jnp.zeros((D, r_pad), jnp.bfloat16).at[:, :R].set(
        params["recipe_emb"].T.astype(jnp.bfloat16))
    prep = {
        "user_emb": params["user_emb"],
        "recipe_emb": params["recipe_emb"],
        "n_recipes": R,
        "score_tbl": score_tbl,
        "unified_map_t": params["unified_map"].T.astype(jnp.bfloat16),
        "layers": [],
    }
    for lp in params["layers"]:
        prep["layers"].append({
            "user_weight_t": lp["user_weight"].T.astype(jnp.bfloat16),
            "recipe_weight_t": lp["recipe_weight"].T.astype(jnp.bfloat16),
            "agg_gate_user_t": lp["agg_gate_user"].T.astype(jnp.bfloat16),
            "agg_gate_recipe_t": lp["agg_gate_recipe"].T.astype(jnp.bfloat16),
            "user_update_t": lp["user_update"].T.astype(jnp.bfloat16),
            "recipe_update_t": lp["recipe_update"].T.astype(jnp.bfloat16),
            "user_date_q_t": lp["user_date_emb"][:Mu].T,     # [D, Mu] f32
            "user_date_k": lp["user_date_emb_k"][:Mu],       # [Mu, D] f32
            "recipe_date_q_t": lp["recipe_date_emb"][:Mi].T, # [D, Mi] f32
            "recipe_date_k": lp["recipe_date_emb_k"][:Mi],   # [Mi, D] f32
        })
    return prep


# ----------------------------------------------------------------------------
# DSGR forward (eval mode: score + neg_score).  feat_drop/attn_drop = identity.
# ----------------------------------------------------------------------------
def dsgr_forward(prep, graph, user_index, neg_tar):
    user_h = prep["user_emb"][graph["user_id"]]          # [Nu, D] f32
    item_h = prep["recipe_emb"][graph["item_id"]]        # [Ni, D] f32
    user_layer = []

    for lp in prep["layers"]:
        # node-wise linear projections (feat_drop = identity in eval), bf16 out
        u_w = pallas_linear(user_h, lp["user_weight_t"])      # [Nu, D] bf16
        i_w = pallas_linear(item_h, lp["recipe_weight_t"])    # [Ni, D] bf16

        # --- 'by' edges: items -> users (mailbox gathered in-kernel) --------
        new_user_h = dsgr_reduce(
            graph["user_nbr"], graph["user_nbr_time"],
            i_w, u_w, user_h,
            lp["user_date_q_t"], lp["user_date_k"],
            lp["agg_gate_user_t"], lp["user_update_t"])

        # --- 'pby' edges: users -> items -------------------------------------
        new_item_h = dsgr_reduce(
            graph["item_nbr"], graph["item_nbr_time"],
            u_w, i_w, item_h,
            lp["recipe_date_q_t"], lp["recipe_date_k"],
            lp["agg_gate_recipe_t"], lp["recipe_update_t"])

        user_h, item_h = new_user_h, new_item_h

        # pick the query user of each batched sub-graph
        sizes = graph["user_batch_sizes"]
        t = jnp.roll(jnp.cumsum(sizes), 1).at[0].set(0)
        new_user_index = t + user_index
        user_layer.append(user_h[new_user_index])

    unified = pallas_linear(jnp.concatenate(user_layer, axis=-1),
                            prep["unified_map_t"])        # [B, D] bf16
    score = dsgr_score(unified, prep["score_tbl"], prep["n_recipes"])  # [B, R]
    # neg_emb = recipe_emb[neg_tar]  =>  neg_score[b, n] == score[b, neg_tar[b, n]]
    neg_score = jnp.take_along_axis(score, neg_tar, axis=1)
    return score, neg_score


# ----------------------------------------------------------------------------
if __name__ == "__main__":
    key = jax.random.PRNGKey(0)
    D = 32          # hidden size
    M = 8           # fixed in-degree (dense mailbox size)
    NU = 16         # user graph nodes (2 sub-graphs of 8)
    NI = 16         # item graph nodes
    N_USERS = 20    # user vocab
    N_RECIPES = 24  # recipe vocab
    B = 2           # batched query users
    N_NEG = 5
    NLAYERS = 2

    k_par, k_uid, k_iid, k_un, k_in, k_ut, k_it, k_neg = jax.random.split(key, 8)

    params = init_params(k_par, N_USERS, N_RECIPES, D, NLAYERS)
    prep = prepare_params(params, Mu=M, Mi=M)

    graph = {
        "user_id": jax.random.randint(k_uid, (NU,), 0, N_USERS),
        "item_id": jax.random.randint(k_iid, (NI,), 0, N_RECIPES),
        "user_nbr": jax.random.randint(k_un, (NU, M), 0, NI),
        "item_nbr": jax.random.randint(k_in, (NI, M), 0, NU),
        # distinct per-row timestamps (a random permutation of 0..M-1)
        "user_nbr_time": jnp.argsort(jax.random.uniform(k_ut, (NU, M)), axis=1).astype(jnp.int32),
        "item_nbr_time": jnp.argsort(jax.random.uniform(k_it, (NI, M)), axis=1).astype(jnp.int32),
        "user_batch_sizes": jnp.array([8, 8], dtype=jnp.int32),
    }
    user_index = jnp.array([2, 3], dtype=jnp.int32)
    neg_tar = jax.random.randint(k_neg, (B, N_NEG), 0, N_RECIPES)

    score, neg_score = dsgr_forward(prep, graph, user_index, neg_tar)
    jax.block_until_ready((score, neg_score))
    assert score.shape == (B, N_RECIPES) and neg_score.shape == (B, N_NEG)
    assert bool(jnp.all(jnp.isfinite(score))) and bool(jnp.all(jnp.isfinite(neg_score)))
    print("KERNEL_OK")
</pallas_src>

<mosaic_0001>
module attributes {stable_mosaic.version = 11 : i64} {
  func.func @_linear_kernel(%arg0: i32, %arg1: memref<16x32xbf16, #tpu.memory_space<vmem>>, %arg2: memref<32x32xbf16, #tpu.memory_space<vmem>>, %arg3: memref<16x32xbf16, #tpu.memory_space<vmem>>) attributes {dimension_semantics = [#tpu.dimension_semantics<parallel>], iteration_bounds = array<i64: 1>, scalar_prefetch = 0 : i64, scratch_operands = 0 : i64, tpu.core_type = #tpu.core_type<tc>, window_params = [{transform_indices = @transform_0, window_bounds = array<i64: 16, 32>}, {pipeline_mode = #tpu.pipeline_mode<synchronous>, transform_indices = @transform_1, window_bounds = array<i64: 32, 32>}, {transform_indices = @transform_2, window_bounds = array<i64: 16, 32>}]} {
    %c0 = arith.constant 0 : index
    %c0_0 = arith.constant 0 : index
    %0 = vector.load %arg1[%c0, %c0_0] : memref<16x32xbf16, #tpu.memory_space<vmem>>, vector<16x32xbf16>
    %c0_1 = arith.constant 0 : index
    %c0_2 = arith.constant 0 : index
    %1 = vector.load %arg2[%c0_1, %c0_2] : memref<32x32xbf16, #tpu.memory_space<vmem>>, vector<32x32xbf16>
    %cst = arith.constant dense<0.000000e+00> : vector<16x32xf32>
    %2 = tpu.matmul %0, %1, %cst {dimension_numbers = #tpu.dot_dimension_numbers<[1], [0], [0], [1], [0, 0, 1, 1], [], []>} : vector<16x32xbf16>, vector<32x32xbf16>, vector<16x32xf32> -> vector<16x32xf32>
    %3 = arith.truncf %2 : vector<16x32xf32> to vector<16x32xbf16>
    %c0_3 = arith.constant 0 : index
    %c0_4 = arith.constant 0 : index
    %4 = vector.load %arg3[%c0_3, %c0_4] : memref<16x32xbf16, #tpu.memory_space<vmem>>, vector<16x32xbf16>
    tpu.vector_store %arg3[%c0_3, %c0_4], %3 {strides = array<i32>} : memref<16x32xbf16, #tpu.memory_space<vmem>>, vector<16x32xbf16>,
    return
  }
  func.func @transform_0(%arg0: i32) -> (i32, i32) {
    %c0_i32 = arith.constant 0 : i32
    %c0_i32_0 = arith.constant 0 : i32
    return %arg0, %c0_i32 : i32, i32
  }
  func.func @transform_1(%arg0: i32) -> (i32, i32) {
    %c0_i32 = arith.constant 0 : i32
    %c0_i32_0 = arith.constant 0 : i32
    %c0_i32_1 = arith.constant 0 : i32
    return %c0_i32, %c0_i32_0 : i32, i32
  }
  func.func @transform_2(%arg0: i32) -> (i32, i32) {
    %c0_i32 = arith.constant 0 : i32
    %c0_i32_0 = arith.constant 0 : i32
    return %arg0, %c0_i32 : i32, i32
  }
}

</mosaic_0001>

<llo_original>
// kernel: tpu_custom_call.1
$region0: #{tpu_custom_call.1}
  #allocation0 [shape = 'u32[]', space=smem, size = 0x4, offset = 0x4, fixed_abs, tag = 'smem constant byte address 0x4 - core index']
  #allocation1 [shape = 'u32[144,128]{1,0:T(1,128)}', space=vmem, size = 0x12000, scoped, tag = 'internal scratch']
  %s0 = inlined_call_operand.hbm [shape: bf16[16,32], index: 0, kind: input, shape index: {}]
  %s1 = inlined_call_operand.hbm [shape: bf16[32,32], index: 1, kind: input, shape index: {}]
  %s2 = inlined_call_operand.hbm [shape: bf16[16,32], index: 2, kind: output, shape index: {}]
  %s3 = sld [smem:[#allocation0]]
  $region26: #{tpu_custom_call.1} parent=0
    _
  %s5 = ssub.s32 1, %s3
  %s6 = scalar_select 0, %s5, %s3
  $region1: #{tpu_custom_call.1} parent=0
    #allocation2 [shape = 'u8[4096]{0}', space=vmem, size = 0x1000, scoped, tag = 'input window, operand 0, single buffered']
    #allocation3 [shape = 's32[1]{0}', space=sflag, size = 0x4, scoped, tag = 'scoped memory for tpu_custom_call.1']
    #allocation4 [shape = 's32[1]{0}', space=sflag, size = 0x4, scoped, tag = 'scoped memory for tpu_custom_call.1']
    #allocation5 [shape = 'u8[8192]{0}', space=vmem, size = 0x2000, scoped, tag = 'input window, operand 1, single buffered']
    #allocation6 [shape = 's32[1]{0}', space=sflag, size = 0x4, scoped, tag = 'scoped memory for tpu_custom_call.1']
    #allocation7 [shape = 'u8[4096]{0}', space=vmem, size = 0x1000, scoped, tag = 'output window, operand 0, single buffered']
    %7 = vsyncpa [#allocation3], 0
    %8 = vsyncpa [#allocation6], 0
    %9 = vsyncpa [#allocation4], 0
    // Predicated region
    $region2: #{tpu_custom_call.1} parent=1 // pred_check
      _
    $region3: #{tpu_custom_call.1} parent=1 // pred_check_branch
      %11 = sbr.rel (0) target = $region5
    $region4: #{tpu_custom_call.1} parent=1 // pred_region
      %s13 = ssub.s32 128, 128
      %14 = vsyncadd [#allocation3], %s13
      %s15 = sshll.u32 [#allocation2], 4
      %s16 = int_to_ptr.vmem [resolvable:$true] %s15
      %21 = dma.hbm_to_vmem [thread:$0]  %s0, 128, %s16, [#allocation3], 64, 64, 4
    $region5: #{tpu_custom_call.1} parent=1 // pred_fallthru
      _
    // Predicated region
    $region6: #{tpu_custom_call.1} parent=1 // pred_check
      _
    $region7: #{tpu_custom_call.1} parent=1 // pred_check_branch
      %23 = sbr.rel (0) target = $region9
    $region8: #{tpu_custom_call.1} parent=1 // pred_region
      %s25 = ssub.s32 256, 256
      %26 = vsyncadd [#allocation6], %s25
      %s27 = sshll.u32 [#allocation5], 4
      %s28 = int_to_ptr.vmem [resolvable:$true] %s27
      %33 = dma.hbm_to_vmem [thread:$0]  %s1, 256, %s28, [#allocation6], 64, 64, 4
    $region9: #{tpu_custom_call.1} parent=1 // pred_fallthru
      _
    // Predicated region
    $region10: #{tpu_custom_call.1} parent=1 // pred_check
      _
    $region11: #{tpu_custom_call.1} parent=1 // pred_check_branch
      %35 = sbr.rel (0) target = $region13
    $region12: #{tpu_custom_call.1} parent=1 // pred_region
      %36 = dma.done [#allocation3], 128
    $region13: #{tpu_custom_call.1} parent=1 // pred_fallthru
      _
    // Predicated region
    $region14: #{tpu_custom_call.1} parent=1 // pred_check
      _
    $region15: #{tpu_custom_call.1} parent=1 // pred_check_branch
      %38 = sbr.rel (0) target = $region17
    $region16: #{tpu_custom_call.1} parent=1 // pred_region
      %39 = dma.done [#allocation6], 256
    $region17: #{tpu_custom_call.1} parent=1 // pred_fallthru
      _
    %v41 = vld [vmem:[#allocation2] sm:$0xf]
    %v42 = vld [vmem:[#allocation2 + $0x4] sm:$0xf]
    %v43 = vld [vmem:[#allocation5] sm:$0xf]
    %v44 = vld [vmem:[#allocation5 + $0x4] sm:$0xf]
    %v45 = vld [vmem:[#allocation5 + $0x8] sm:$0xf]
    %v46 = vld [vmem:[#allocation5 + $0xc] sm:$0xf]
    %v49 = vunpack.c.l.b16 %v41
    %v50 = vunpack.c.l.b16 %v42
    %v51 = vpack.c.b16 %v50, %v49
    %v56 = vunpack.c.l.b16 %v43
    %v57 = vunpack.c.l.b16 %v44
    %v58 = vunpack.c.l.b16 %v45
    %v59 = vunpack.c.l.b16 %v46
    %v60 = vpack.c.b16 %v57, %v56
    %v61 = vpack.c.b16 %v59, %v58
    %vm64 = vcmask 261120
    %v66 = vsel %vm64, %v51, 0
    %68 = vmatprep.subr.bf16.mxu0 0
    %69 = vmatpush1.bf16.msra.mxu0 %v60
    %70 = vmatprep.subr.bf16.mxu0 0
    %71 = vmatpush1.bf16.msra.mxu0 %v61
    %72 = vmatprep.subr.bf16.mxu0 0
    %73 = vmatpush1.bf16.msra.mxu0 0
    %74 = vmatprep.subr.bf16.mxu0 0
    %75 = vmatpush1.bf16.msra.mxu0 0
    %76 = vmatprep.subr.bf16.mxu0 0
    %77 = vmatpush1.bf16.msra.mxu0 0
    %78 = vmatprep.subr.bf16.mxu0 0
    %79 = vmatpush1.bf16.msra.mxu0 0
    %80 = vmatprep.subr.bf16.mxu0 0
    %81 = vmatpush1.bf16.msra.mxu0 0
    %82 = vmatprep.subr.bf16.mxu0 0
    %83 = vmatpush1.bf16.msra.mxu0 0
    %84 = vmatprep.subr.bf16.mxu0 0
    %85 = vmatpush1.bf16.msra.mxu0 0
    %86 = vmatprep.subr.bf16.mxu0 0
    %87 = vmatpush1.bf16.msra.mxu0 0
    %88 = vmatprep.subr.bf16.mxu0 0
    %89 = vmatpush1.bf16.msra.mxu0 0
    %90 = vmatprep.subr.bf16.mxu0 0
    %91 = vmatpush1.bf16.msra.mxu0 0
    %92 = vmatprep.subr.bf16.mxu0 0
    %93 = vmatpush1.bf16.msra.mxu0 0
    %94 = vmatprep.subr.bf16.mxu0 0
    %95 = vmatpush1.bf16.msra.mxu0 0
    %96 = vmatprep.subr.bf16.mxu0 0
    %97 = vmatpush1.bf16.msra.mxu0 0
    %98 = vmatprep.subr.bf16.mxu0 0
    %99 = vmatpush1.bf16.msra.mxu0 0
    %100 = vmatprep.mubr.bf16.mxu0 0
    %101 = vmatmul.mubr.bf16.gmra.mrb[0].mxu0 %v66
    %v102 = vpop.f32.mrb[0].mxu0
    %v103 = vadd.f32 0.0, %v102
    %v104 = vpop.f32.mrb[0].mxu0
    %v105 = vpop.f32.mrb[0].mxu0
    %v106 = vadd.f32 0.0, %v105
    %v107 = vpop.f32.mrb[0].mxu0
    %108 = vdwg.mxu0
    %v109 = vpack.c.bf16 %v106, %v103
    %v111 = vunpack.c.l.b16 %v109
    %v112 = vunpack.c.h.b16 %v109
    %v113 = vpack.c.b16 %v111, %v111
    %v114 = vpack.c.b16 %v112, %v112
    %vm117 = vcmask 257024
    %118 = vst.msk [vmem:[#allocation7] sm:$0xf] %vm117, %v113
    %119 = vst.msk [vmem:[#allocation7 + $0x4] sm:$0xf] %vm117, %v114
    // Predicated region
    $region18: #{tpu_custom_call.1} parent=1 // pred_check
      _
    $region19: #{tpu_custom_call.1} parent=1 // pred_check_branch
      %121 = sbr.rel (0) target = $region21
    $region20: #{tpu_custom_call.1} parent=1 // pred_region
      %s123 = ssub.s32 128, 128
      %124 = vsyncadd [#allocation4], %s123
      %s125 = sshll.u32 [#allocation7], 4
      %s126 = int_to_ptr.vmem [resolvable:$true] %s125
      %131 = dma.vmem_to_hbm [thread:$0]  %s126, 128, %s2, [#allocation4], 64, 64, 4
    $region21: #{tpu_custom_call.1} parent=1 // pred_fallthru
      _
    // Predicated region
    $region22: #{tpu_custom_call.1} parent=1 // pred_check
      _
    $region23: #{tpu_custom_call.1} parent=1 // pred_check_branch
      %133 = sbr.rel (0) target = $region25
    $region24: #{tpu_custom_call.1} parent=1 // pred_region
      %134 = dma.done [#allocation4], 128
    $region25: #{tpu_custom_call.1} parent=1 // pred_fallthru
      _
    %135 = vsyncpa [#allocation3], 1
    %136 = vsyncpa [#allocation6], 1
    %137 = vsyncpa [#allocation4], 1

</llo_original>
